<compile_context>
chip_gen: v7x
topology: tpu7x:2x2x1
jax: 0.10.0
libtpu: 0.0.40
codegen_flags: <defaults>
</compile_context>

<pallas_src>
import functools

import jax
import jax.numpy as jnp
from jax import lax
from jax.experimental import pallas as pl
from jax.experimental.pallas import tpu as pltpu


def _triplet_kernel(a_ref, p_ref, n_ref, out_ref, acc_ref, *,
                    num_rows, block_rows, tiles_per_core, margin, needs_mask):
    c = pl.program_id(0)   # core axis ("parallel")
    i = pl.program_id(1)   # row-tile axis within a core ("arbitrary")

    @pl.when(i == 0)
    def _():
        acc_ref[...] = jnp.zeros_like(acc_ref)

    # Inputs may be bf16; all distance math in f32.
    a = a_ref[...].astype(jnp.float32)
    p = p_ref[...].astype(jnp.float32)
    n = n_ref[...].astype(jnp.float32)

    if margin is None:
        dap = a - p
        dan = a - n
    else:
        # nn.TripletMarginLoss uses pairwise_distance with eps = 1e-6.
        eps = jnp.float32(1e-6)
        dap = a - p + eps
        dan = a - n + eps

    d_ap = jnp.sqrt(jnp.sum(dap * dap, axis=1, keepdims=True))   # (TM, 1)
    d_an = jnp.sqrt(jnp.sum(dan * dan, axis=1, keepdims=True))   # (TM, 1)

    if margin is None:
        # SoftMarginLoss(x, y=1) = mean(log(1 + exp(-x))), numerically stable.
        x = d_an - d_ap
        per_row = jnp.maximum(-x, 0.0) + jnp.log1p(jnp.exp(-jnp.abs(x)))
    else:
        per_row = jnp.maximum(d_ap - d_an + jnp.float32(margin), 0.0)

    if needs_mask:
        # Keep the select (NOT a multiply-by-mask): garbage/NaN rows from a
        # partial or duplicated tile must not propagate.
        row = lax.broadcasted_iota(jnp.int32, (block_rows, 1), 0)
        tile_idx = c * tiles_per_core + i          # un-clamped global tile id
        global_row = tile_idx * block_rows + row
        per_row = jnp.where(global_row < num_rows, per_row, 0.0)

    acc_ref[...] += per_row

    @pl.when(i == pl.num_programs(1) - 1)
    def _():
        out_ref[...] = jnp.sum(acc_ref[...]).reshape(1, 1, 1)


def _round_up(x, m):
    return (x + m - 1) // m * m


def _sublane_granularity(dtype):
    # f32 -> 8, bf16 -> 16, int8/fp8 -> 32 (native sublane tiling).
    return max(8, 32 // jnp.dtype(dtype).itemsize)


def _vmem_budgets():
    """(tile budget bytes, vmem_limit_bytes, default #cores) per generation."""
    try:
        cap = int(pltpu.get_tpu_info().vmem_capacity_bytes)
    except Exception:
        cap = 128 * 1024 * 1024
    if cap <= 80 * 1024 * 1024:
        # v7x: 64 MiB VMEM per TensorCore, 2 TensorCores per chip.
        return 24 * 1024 * 1024, 48 * 1024 * 1024, 2
    # v5e / v6e: 128 MiB VMEM, single TensorCore.
    return 40 * 1024 * 1024, 64 * 1024 * 1024, 1


def _choose_block_rows(num_rows, feat, dtype, budget_bytes):
    itemsize = jnp.dtype(dtype).itemsize
    gran = _sublane_granularity(dtype)
    # Per-row VMEM cost: 3 inputs x 2 pipeline buffers, ~6 f32 temporaries for
    # the distance math, plus one lane-padded f32 accumulator row (128*4 B).
    per_row = 6 * feat * itemsize + 6 * feat * 4 + 512
    tm = budget_bytes // per_row
    tm = max(gran, min(4096, (tm // gran) * gran))
    tm = min(tm, _round_up(num_rows, gran))
    return tm


def triplet_loss(anchor, pos, neg, margin=None, block_rows=None, num_cores=None):
    """Pallas implementation of TripletLoss.forward.

    anchor/pos/neg: (N, D) arrays (f32 or bf16). Returns a scalar f32 loss.
    """
    assert anchor.shape == pos.shape == neg.shape
    assert anchor.dtype == pos.dtype == neg.dtype
    num_rows, feat = anchor.shape

    gran = _sublane_granularity(anchor.dtype)
    tile_budget, vmem_limit, default_cores = _vmem_budgets()
    if block_rows is None:
        block_rows = _choose_block_rows(num_rows, feat, anchor.dtype, tile_budget)
    else:
        block_rows = max(gran, _round_up(int(block_rows), gran))

    num_tiles = pl.cdiv(num_rows, block_rows)
    if num_cores is None:
        num_cores = default_cores
    num_cores = max(1, min(int(num_cores), num_tiles))
    tiles_per_core = pl.cdiv(num_tiles, num_cores)
    total_tiles = num_cores * tiles_per_core
    needs_mask = (total_tiles * block_rows) != num_rows
    last_tile = num_tiles - 1

    def in_index_map(c, i):
        # Clamp so a redundant trailing tile (odd split across cores) re-reads
        # the last valid tile instead of DMA-ing out of bounds; its rows are
        # masked out inside the kernel via the un-clamped global row index.
        return (jnp.minimum(c * tiles_per_core + i, last_tile), 0)

    kernel = functools.partial(
        _triplet_kernel,
        num_rows=num_rows,
        block_rows=block_rows,
        tiles_per_core=tiles_per_core,
        margin=None if margin is None else float(margin),
        needs_mask=needs_mask,
    )

    in_spec = pl.BlockSpec((block_rows, feat), in_index_map)
    partials = pl.pallas_call(
        kernel,
        out_shape=jax.ShapeDtypeStruct((num_cores, 1, 1), jnp.float32),
        grid_spec=pltpu.PrefetchScalarGridSpec(
            num_scalar_prefetch=0,
            grid=(num_cores, tiles_per_core),
            in_specs=[in_spec, in_spec, in_spec],
            out_specs=pl.BlockSpec((1, 1, 1), lambda c, i: (c, 0, 0)),
            scratch_shapes=[pltpu.VMEM((block_rows, 1), jnp.float32)],
        ),
        compiler_params=pltpu.CompilerParams(
            # Core axis is independent ("parallel", uses both TCs on v7x);
            # the row-tile axis carries the resident accumulator ("arbitrary").
            dimension_semantics=("parallel", "arbitrary"),
            vmem_limit_bytes=vmem_limit,
        ),
    )(anchor, pos, neg)
    return jnp.sum(partials) / jnp.float32(num_rows)


def _ref_triplet_loss(anchor, pos, neg, margin=None):
    # Pure-JAX reference for sanity checking.
    a = anchor.astype(jnp.float32)
    p = pos.astype(jnp.float32)
    n = neg.astype(jnp.float32)
    if margin is None:
        ap = jnp.linalg.norm(a - p, axis=1)
        an = jnp.linalg.norm(a - n, axis=1)
        return jnp.mean(jax.nn.softplus(-(an - ap)))
    else:
        eps = 1e-6
        d_ap = jnp.linalg.norm(a - p + eps, axis=1)
        d_an = jnp.linalg.norm(a - n + eps, axis=1)
        return jnp.mean(jnp.maximum(d_ap - d_an + margin, 0.0))


if __name__ == "__main__":
    key = jax.random.PRNGKey(0)
    k1, k2, k3 = jax.random.split(key, 3)

    # Small case consistent with the module: (batch, embedding_dim).
    N, D = 8, 32
    anchor = jax.random.normal(k1, (N, D), dtype=jnp.float32)
    pos = jax.random.normal(k2, (N, D), dtype=jnp.float32)
    neg = jax.random.normal(k3, (N, D), dtype=jnp.float32)

    # Mode 1: margin=None -> SoftMarginLoss on (an_dist - ap_dist).
    loss_soft = triplet_loss(anchor, pos, neg, margin=None)
    ref_soft = _ref_triplet_loss(anchor, pos, neg, margin=None)
    # Mode 2: margin=0.3 -> TripletMarginLoss(margin=0.3, p=2).
    loss_margin = triplet_loss(anchor, pos, neg, margin=0.3)
    ref_margin = _ref_triplet_loss(anchor, pos, neg, margin=0.3)
    jax.block_until_ready((loss_soft, loss_margin))
    assert jnp.allclose(loss_soft, ref_soft, atol=1e-5, rtol=1e-5), (loss_soft, ref_soft)
    assert jnp.allclose(loss_margin, ref_margin, atol=1e-5, rtol=1e-5), (loss_margin, ref_margin)

    # Multi-tile grid, odd tile count, masked partial last tile, and the
    # clamped duplicate-tile path when forcing the 2-core split.
    N2, D2 = 37, 128
    k4, k5, k6 = jax.random.split(jax.random.PRNGKey(1), 3)
    a2 = jax.random.normal(k4, (N2, D2), dtype=jnp.float32)
    p2 = jax.random.normal(k5, (N2, D2), dtype=jnp.float32)
    n2 = jax.random.normal(k6, (N2, D2), dtype=jnp.float32)
    for m in (None, 0.5):
        want = _ref_triplet_loss(a2, p2, n2, margin=m)
        for cores in (1, 2):
            got = triplet_loss(a2, p2, n2, margin=m, block_rows=16, num_cores=cores)
            assert jnp.allclose(got, want, atol=1e-5, rtol=1e-5), (m, cores, got, want)

    # Even split across 2 "cores", no masking path (8 tiles of 64 rows).
    N3, D3 = 512, 128
    k7, k8, k9 = jax.random.split(jax.random.PRNGKey(2), 3)
    a3 = jax.random.normal(k7, (N3, D3), dtype=jnp.float32)
    p3 = jax.random.normal(k8, (N3, D3), dtype=jnp.float32)
    n3 = jax.random.normal(k9, (N3, D3), dtype=jnp.float32)
    got3 = triplet_loss(a3, p3, n3, margin=0.2, block_rows=64, num_cores=2)
    want3 = _ref_triplet_loss(a3, p3, n3, margin=0.2)
    assert jnp.allclose(got3, want3, atol=1e-5, rtol=1e-5), (got3, want3)

    # Auto block-size path (generation-aware budget) on default core count.
    got3a = triplet_loss(a3, p3, n3, margin=None)
    want3a = _ref_triplet_loss(a3, p3, n3, margin=None)
    assert jnp.allclose(got3a, want3a, atol=1e-5, rtol=1e-5), (got3a, want3a)

    # bf16 inputs (half the HBM bytes); f32 accumulation inside the kernel.
    a4, p4, n4 = (x.astype(jnp.bfloat16) for x in (a2, p2, n2))
    got_bf16 = triplet_loss(a4, p4, n4, margin=0.3, block_rows=16)
    want_bf16 = _ref_triplet_loss(a4, p4, n4, margin=0.3)
    jax.block_until_ready(got_bf16)
    assert jnp.allclose(got_bf16, want_bf16, atol=2e-2, rtol=2e-2), (got_bf16, want_bf16)

    print("KERNEL_OK")
</pallas_src>

<mosaic_0001>
module attributes {stable_mosaic.version = 11 : i64} {
  func.func @_triplet_kernel(%arg0: i32, %arg1: i32, %arg2: memref<8x32xf32, #tpu.memory_space<vmem>>, %arg3: memref<8x32xf32, #tpu.memory_space<vmem>>, %arg4: memref<8x32xf32, #tpu.memory_space<vmem>>, %arg5: memref<1x1x1xf32, #tpu.memory_space<vmem>>, %arg6: memref<8x1xf32, #tpu.memory_space<vmem>>) attributes {dimension_semantics = [#tpu.dimension_semantics<parallel>, #tpu.dimension_semantics<arbitrary>], iteration_bounds = array<i64: 1, 1>, scalar_prefetch = 0 : i64, scratch_operands = 1 : i64, tpu.core_type = #tpu.core_type<tc>, window_params = [{transform_indices = @transform_0, window_bounds = array<i64: 8, 32>}, {transform_indices = @transform_1, window_bounds = array<i64: 8, 32>}, {transform_indices = @transform_2, window_bounds = array<i64: 8, 32>}, {transform_indices = @transform_3, window_bounds = array<i64: 1, 1, 1>}]} {
    %c0_i32 = arith.constant 0 : i32
    %0 = arith.cmpi eq, %arg1, %c0_i32 : i32
    %1 = arith.extui %0 : i1 to i32
    %c0_i32_0 = arith.constant 0 : i32
    %2 = arith.cmpi ne, %1, %c0_i32_0 : i32
    scf.if %2 {
      %cst_16 = arith.constant 0.000000e+00 : f32
      %33 = vector.broadcast %cst_16 : f32 to vector<8x1xf32>
      %c0_17 = arith.constant 0 : index
      %c0_18 = arith.constant 0 : index
      %34 = vector.load %arg6[%c0_17, %c0_18] : memref<8x1xf32, #tpu.memory_space<vmem>>, vector<8x1xf32>
      tpu.vector_store %arg6[%c0_17, %c0_18], %33 {strides = array<i32>} : memref<8x1xf32, #tpu.memory_space<vmem>>, vector<8x1xf32>,
    } else {
    }
    %c0 = arith.constant 0 : index
    %c0_1 = arith.constant 0 : index
    %3 = vector.load %arg2[%c0, %c0_1] : memref<8x32xf32, #tpu.memory_space<vmem>>, vector<8x32xf32>
    %c0_2 = arith.constant 0 : index
    %c0_3 = arith.constant 0 : index
    %4 = vector.load %arg3[%c0_2, %c0_3] : memref<8x32xf32, #tpu.memory_space<vmem>>, vector<8x32xf32>
    %c0_4 = arith.constant 0 : index
    %c0_5 = arith.constant 0 : index
    %5 = vector.load %arg4[%c0_4, %c0_5] : memref<8x32xf32, #tpu.memory_space<vmem>>, vector<8x32xf32>
    %6 = arith.subf %3, %4 : vector<8x32xf32>
    %7 = arith.subf %3, %5 : vector<8x32xf32>
    %8 = arith.mulf %6, %6 : vector<8x32xf32>
    %cst = arith.constant dense<0.000000e+00> : vector<8xf32>
    %9 = vector.multi_reduction <add>, %8, %cst [1] : vector<8x32xf32> to vector<8xf32>
    %10 = vector.shape_cast %9 : vector<8xf32> to vector<8x1xf32>
    %11 = math.sqrt %10 : vector<8x1xf32>
    %12 = arith.mulf %7, %7 : vector<8x32xf32>
    %cst_6 = arith.constant dense<0.000000e+00> : vector<8xf32>
    %13 = vector.multi_reduction <add>, %12, %cst_6 [1] : vector<8x32xf32> to vector<8xf32>
    %14 = vector.shape_cast %13 : vector<8xf32> to vector<8x1xf32>
    %15 = math.sqrt %14 : vector<8x1xf32>
    %16 = arith.subf %15, %11 : vector<8x1xf32>
    %cst_7 = arith.constant 0.000000e+00 : f32
    %17 = vector.broadcast %cst_7 : f32 to vector<8x1xf32>
    %18 = arith.subf %17, %16 : vector<8x1xf32>
    %cst_8 = arith.constant 0.000000e+00 : f32
    %19 = vector.broadcast %cst_8 : f32 to vector<8x1xf32>
    %20 = arith.maximumf %18, %19 : vector<8x1xf32>
    %21 = math.absf %16 : vector<8x1xf32>
    %cst_9 = arith.constant 0.000000e+00 : f32
    %22 = vector.broadcast %cst_9 : f32 to vector<8x1xf32>
    %23 = arith.subf %22, %21 : vector<8x1xf32>
    %24 = math.exp %23 : vector<8x1xf32>
    %25 = math.log1p %24 : vector<8x1xf32>
    %26 = arith.addf %20, %25 : vector<8x1xf32>
    %c0_10 = arith.constant 0 : index
    %c0_11 = arith.constant 0 : index
    %27 = vector.load %arg6[%c0_10, %c0_11] : memref<8x1xf32, #tpu.memory_space<vmem>>, vector<8x1xf32>
    %28 = arith.addf %27, %26 : vector<8x1xf32>
    %c0_12 = arith.constant 0 : index
    %c0_13 = arith.constant 0 : index
    %29 = vector.load %arg6[%c0_12, %c0_13] : memref<8x1xf32, #tpu.memory_space<vmem>>, vector<8x1xf32>
    tpu.vector_store %arg6[%c0_12, %c0_13], %28 {strides = array<i32>} : memref<8x1xf32, #tpu.memory_space<vmem>>, vector<8x1xf32>,
    %c0_i32_14 = arith.constant 0 : i32
    %30 = arith.cmpi eq, %arg1, %c0_i32_14 : i32
    %31 = arith.extui %30 : i1 to i32
    %c0_i32_15 = arith.constant 0 : i32
    %32 = arith.cmpi ne, %31, %c0_i32_15 : i32
    scf.if %32 {
      %c0_16 = arith.constant 0 : index
      %c0_17 = arith.constant 0 : index
      %33 = vector.load %arg6[%c0_16, %c0_17] : memref<8x1xf32, #tpu.memory_space<vmem>>, vector<8x1xf32>
      %34 = vector.shape_cast %33 : vector<8x1xf32> to vector<1x8x1xf32>
      %cst_18 = arith.constant dense<0.000000e+00> : vector<1xf32>
      %35 = vector.multi_reduction <add>, %34, %cst_18 [1, 2] : vector<1x8x1xf32> to vector<1xf32>
      %36 = vector.shape_cast %35 : vector<1xf32> to vector<1x1x1xf32>
      %37 = vector.extract %36[0, 0, 0] : f32 from vector<1x1x1xf32>
      %38 = vector.broadcast %37 : f32 to vector<1x1x1xf32>
      %c0_19 = arith.constant 0 : index
      %c0_20 = arith.constant 0 : index
      %c0_21 = arith.constant 0 : index
      %39 = vector.load %arg5[%c0_19, %c0_20, %c0_21] : memref<1x1x1xf32, #tpu.memory_space<vmem>>, vector<1x1x1xf32>
      tpu.vector_store %arg5[%c0_19, %c0_20, %c0_21], %38 {strides = array<i32>} : memref<1x1x1xf32, #tpu.memory_space<vmem>>, vector<1x1x1xf32>,
    } else {
    }
    return
  }
  func.func @transform_0(%arg0: i32, %arg1: i32) -> (i32, i32) {
    %c1_i32 = arith.constant 1 : i32
    %0 = arith.muli %arg0, %c1_i32 : i32
    %1 = arith.addi %0, %arg1 : i32
    %c0_i32 = arith.constant 0 : i32
    %2 = arith.minsi %1, %c0_i32 : i32
    %c0_i32_0 = arith.constant 0 : i32
    %c0_i32_1 = arith.constant 0 : i32
    return %2, %c0_i32_0 : i32, i32
  }
  func.func @transform_1(%arg0: i32, %arg1: i32) -> (i32, i32) {
    %c1_i32 = arith.constant 1 : i32
    %0 = arith.muli %arg0, %c1_i32 : i32
    %1 = arith.addi %0, %arg1 : i32
    %c0_i32 = arith.constant 0 : i32
    %2 = arith.minsi %1, %c0_i32 : i32
    %c0_i32_0 = arith.constant 0 : i32
    %c0_i32_1 = arith.constant 0 : i32
    return %2, %c0_i32_0 : i32, i32
  }
  func.func @transform_2(%arg0: i32, %arg1: i32) -> (i32, i32) {
    %c1_i32 = arith.constant 1 : i32
    %0 = arith.muli %arg0, %c1_i32 : i32
    %1 = arith.addi %0, %arg1 : i32
    %c0_i32 = arith.constant 0 : i32
    %2 = arith.minsi %1, %c0_i32 : i32
    %c0_i32_0 = arith.constant 0 : i32
    %c0_i32_1 = arith.constant 0 : i32
    return %2, %c0_i32_0 : i32, i32
  }
  func.func @transform_3(%arg0: i32, %arg1: i32) -> (i32, i32, i32) {
    %c0_i32 = arith.constant 0 : i32
    %c0_i32_0 = arith.constant 0 : i32
    %c0_i32_1 = arith.constant 0 : i32
    return %arg0, %c0_i32, %c0_i32_0 : i32, i32, i32
  }
}

</mosaic_0001>

<llo_original>
// kernel: tpu_custom_call.1
$region0: #{tpu_custom_call.1}
  #allocation0 [shape = 'u32[]', space=smem, size = 0x4, offset = 0x4, fixed_abs, tag = 'smem constant byte address 0x4 - core index']
  #allocation1 [shape = 'u32[144,128]{1,0:T(1,128)}', space=vmem, size = 0x12000, scoped, tag = 'internal scratch']
  #allocation2 [shape = 'f32[8,1]{1,0:T(8,128)}', space=vmem, size = 0x1000, scoped, tag = 'scratch operand']
  %s0 = inlined_call_operand.hbm [shape: f32[8,32], index: 0, kind: input, shape index: {}]
  %s1 = inlined_call_operand.hbm [shape: f32[8,32], index: 1, kind: input, shape index: {}]
  %s2 = inlined_call_operand.hbm [shape: f32[8,32], index: 2, kind: input, shape index: {}]
  %s3 = inlined_call_operand.hbm [shape: f32[1,1,1], index: 3, kind: output, shape index: {}]
  %s4 = sld [smem:[#allocation0]]
  $region42: #{tpu_custom_call.1} parent=0
    _
  %s6 = ssub.s32 1, %s4
  %s7 = scalar_select 0, %s6, %s4
  $region1: #{tpu_custom_call.1} parent=0
    #allocation3 [shape = 'u8[4096]{0}', space=vmem, size = 0x1000, scoped, tag = 'input window, operand 0, single buffered']
    #allocation4 [shape = 's32[1]{0}', space=sflag, size = 0x4, scoped, tag = 'scoped memory for tpu_custom_call.1']
    #allocation5 [shape = 's32[1]{0}', space=sflag, size = 0x4, scoped, tag = 'scoped memory for tpu_custom_call.1']
    #allocation6 [shape = 'u8[4096]{0}', space=vmem, size = 0x1000, scoped, tag = 'input window, operand 1, single buffered']
    #allocation7 [shape = 's32[1]{0}', space=sflag, size = 0x4, scoped, tag = 'scoped memory for tpu_custom_call.1']
    #allocation8 [shape = 'u8[4096]{0}', space=vmem, size = 0x1000, scoped, tag = 'input window, operand 2, single buffered']
    #allocation9 [shape = 'u8[512]{0}', space=vmem, size = 0x400, scoped, tag = 'output window, operand 0, single buffered']
    %8 = vsyncpa [#allocation4], 0
    %9 = vsyncpa [#allocation7], 0
    %10 = vsyncpa [#allocation5], 0
    // Predicated region
    $region2: #{tpu_custom_call.1} parent=1 // pred_check
      _
    $region3: #{tpu_custom_call.1} parent=1 // pred_check_branch
      %12 = sbr.rel (0) target = $region5
    $region4: #{tpu_custom_call.1} parent=1 // pred_region
      %s13 = sadd.s32 0, 0
      %p14 = scmp.lt.s32.totalorder %s13, 0
      %s15 = scalar_select %p14, %s13, 0
      %s17 = ssub.s32 128, 128
      %18 = vsyncadd [#allocation4], %s17
      %s19 = smul.addr %s15, 128
      %s20 = scalar_lea.hbm %s0, %s19
      %s22 = sshll.u32 [#allocation3], 4
      %s23 = int_to_ptr.vmem [resolvable:$true] %s22
      %25 = dma.hbm_to_vmem [thread:$0]  %s20, 128, %s23, [#allocation4]
    $region5: #{tpu_custom_call.1} parent=1 // pred_fallthru
      _
    // Predicated region
    $region6: #{tpu_custom_call.1} parent=1 // pred_check
      _
    $region7: #{tpu_custom_call.1} parent=1 // pred_check_branch
      %27 = sbr.rel (0) target = $region9
    $region8: #{tpu_custom_call.1} parent=1 // pred_region
      %s28 = sadd.s32 0, 0
      %p29 = scmp.lt.s32.totalorder %s28, 0
      %s30 = scalar_select %p29, %s28, 0
      %s32 = ssub.s32 128, 128
      %33 = vsyncadd [#allocation7], %s32
      %s34 = smul.addr %s30, 128
      %s35 = scalar_lea.hbm %s1, %s34
      %s37 = sshll.u32 [#allocation6], 4
      %s38 = int_to_ptr.vmem [resolvable:$true] %s37
      %40 = dma.hbm_to_vmem [thread:$0]  %s35, 128, %s38, [#allocation7]
    $region9: #{tpu_custom_call.1} parent=1 // pred_fallthru
      _
    // Predicated region
    $region10: #{tpu_custom_call.1} parent=1 // pred_check
      _
    $region11: #{tpu_custom_call.1} parent=1 // pred_check_branch
      %42 = sbr.rel (0) target = $region13
    $region12: #{tpu_custom_call.1} parent=1 // pred_region
      %s43 = sadd.s32 0, 0
      %p44 = scmp.lt.s32.totalorder %s43, 0
      %s45 = scalar_select %p44, %s43, 0
      %s47 = ssub.s32 128, 128
      %48 = vsyncadd [#allocation7], %s47
      %s49 = smul.addr %s45, 128
      %s50 = scalar_lea.hbm %s2, %s49
      %s52 = sshll.u32 [#allocation8], 4
      %s53 = int_to_ptr.vmem [resolvable:$true] %s52
      %55 = dma.hbm_to_vmem [thread:$0]  %s50, 128, %s53, [#allocation7]
    $region13: #{tpu_custom_call.1} parent=1 // pred_fallthru
      _
    // Predicated region
    $region14: #{tpu_custom_call.1} parent=1 // pred_check
      _
    $region15: #{tpu_custom_call.1} parent=1 // pred_check_branch
      %57 = sbr.rel (0) target = $region17
    $region16: #{tpu_custom_call.1} parent=1 // pred_region
      %58 = dma.done [#allocation4], 128
    $region17: #{tpu_custom_call.1} parent=1 // pred_fallthru
      _
    // Predicated region
    $region18: #{tpu_custom_call.1} parent=1 // pred_check
      _
    $region19: #{tpu_custom_call.1} parent=1 // pred_check_branch
      %60 = sbr.rel (0) target = $region21
    $region20: #{tpu_custom_call.1} parent=1 // pred_region
      %61 = dma.done [#allocation7], 128
    $region21: #{tpu_custom_call.1} parent=1 // pred_fallthru
      _
    // Predicated region
    $region22: #{tpu_custom_call.1} parent=1 // pred_check
      _
    $region23: #{tpu_custom_call.1} parent=1 // pred_check_branch
      %63 = sbr.rel (0) target = $region25
    $region24: #{tpu_custom_call.1} parent=1 // pred_region
      %64 = dma.done [#allocation7], 128
    $region25: #{tpu_custom_call.1} parent=1 // pred_fallthru
      _
    %s65 = sadd.s32 0, 0
    %p66 = scmp.lt.s32.totalorder %s65, 0
    %s67 = scalar_select %p66, %s65, 0
    %s68 = sadd.s32 0, 0
    %p69 = scmp.lt.s32.totalorder %s68, 0
    %s70 = scalar_select %p69, %s68, 0
    %s71 = sadd.s32 0, 0
    %p72 = scmp.lt.s32.totalorder %s71, 0
    %s73 = scalar_select %p72, %s71, 0
    %p74 = scmp.eq.s32.totalorder 0, 0
    // Predicated region
    $region26: #{tpu_custom_call.1} parent=1 // pred_check
      %p75 = pneg %p74
    $region27: #{tpu_custom_call.1} parent=1 // pred_check_branch
      %77 = sbr.rel (%p75) target = $region29
    $region28: #{tpu_custom_call.1} parent=1 // pred_region
      %vm78 = vcmask 7168
      %79 = vst.msk [vmem:[#allocation2] sm:$0xff] %vm78, 0.0
    $region29: #{tpu_custom_call.1} parent=1 // pred_fallthru
      _
    %v80 = vld [vmem:[#allocation3] sm:$0xff]
    %v81 = vld [vmem:[#allocation6] sm:$0xff]
    %v82 = vld [vmem:[#allocation8] sm:$0xff]
    %v83 = vsub.f32 %v80, %v81
    %v84 = vsub.f32 %v80, %v82
    %v85 = vmul.f32 %v83, %v83
    %vm86 = vcmask 261120
    %v87 = vsel %vm86, %v85, 0.0
    %88 = vadd.xlane.f32.xlu0 %v87
    %v89 = vpop.xlane.xlu0 %88
    %v90 = vrsqrt.pop %v89
    %v91 = vmul.f32 %v89, %v90
    %vm92 = vcmp.eq.f32.partialorder %v89, inf
    %v93 = vsel %vm92, %v89, %v91
    %vm94 = vcmp.eq.f32.partialorder %v89, 0.0
    %v95 = vand.u32 %v89, 2147483648
    %v96 = vsel %vm94, %v95, %v93
    %v97 = vmul.f32 %v84, %v84
    %v98 = vsel %vm86, %v97, 0.0
    %99 = vadd.xlane.f32.xlu0 %v98
    %v100 = vpop.xlane.xlu0 %99
    %v101 = vrsqrt.pop %v100
    %v102 = vmul.f32 %v100, %v101
    %vm103 = vcmp.eq.f32.partialorder %v100, inf
    %v104 = vsel %vm103, %v100, %v102
    %vm105 = vcmp.eq.f32.partialorder %v100, 0.0
    %v106 = vand.u32 %v100, 2147483648
    %v107 = vsel %vm105, %v106, %v104
    %v108 = vsub.f32 %v107, %v96
    %v109 = vsub.f32 0.0, %v108
    %v110 = vmax.f32 %v109, 0.0
    %v111 = vand.u32 2147483647, %v108
    %v112 = vsub.f32 0.0, %v111
    %v113 = vmul.f32 %v112, 1.442695
    %v114 = vpow.pop %v113
    %v115 = vadd.f32 %v114, 1.0
    %v116 = vlog2.pop %v115
    %v117 = vmul.f32 %v116, 0.6931472
    %v118 = vmul.f32 -0.5, %v114
    %v119 = vadd.f32 %v118, 1.0
    %v120 = vmul.f32 %v119, %v114
    %v121 = vand.u32 2147483647, %v114
    %vm122 = vcmp.lt.f32.partialorder %v121, 0.0004427343
    %v123 = vsel %vm122, %v120, %v117
    %v124 = vadd.f32 %v110, %v123
    %v125 = vld [vmem:[#allocation2] sm:$0xff]
    %v126 = vadd.f32 %v125, %v124
    %vm127 = vcmask 7168
    %128 = vst.msk [vmem:[#allocation2] sm:$0xff] %vm127, %v126
    // Predicated region
    $region30: #{tpu_custom_call.1} parent=1 // pred_check
      %p129 = pneg %p74
    $region31: #{tpu_custom_call.1} parent=1 // pred_check_branch
      %131 = sbr.rel (%p129) target = $region33
    $region32: #{tpu_custom_call.1} parent=1 // pred_region
      %v132 = vld [vmem:[#allocation2] sm:$0xff]
      %v133 = vsel %vm127, %v132, 0.0
      %134 = vadd.xlane.f32.xlu0 %v133
      %v135 = vpop.xlane.xlu0 %134
      %v136 = vrot.slane %v135, 4
      %v137 = vadd.f32 %v135, %v136
      %v138 = vrot.slane %v137, 2
      %v139 = vadd.f32 %v137, %v138
      %v140 = vrot.slane %v139, 1
      %v141 = vadd.f32 %v139, %v140
      %s142 = vtos %v141
      %v143 = vstv %s142
      %vm144 = vcmask 0
      %145 = vst.msk [vmem:[#allocation9] sm:$0x1] %vm144, %v143
    $region33: #{tpu_custom_call.1} parent=1 // pred_fallthru
      _
    // Predicated region
    $region34: #{tpu_custom_call.1} parent=1 // pred_check
      _
    $region35: #{tpu_custom_call.1} parent=1 // pred_check_branch
      %147 = sbr.rel (0) target = $region37
    $region36: #{tpu_custom_call.1} parent=1 // pred_region
      %s149 = ssub.s32 16, 16
      %150 = vsyncadd [#allocation5], %s149
      %s152 = sshll.u32 [#allocation9], 4
      %s153 = int_to_ptr.vmem [resolvable:$true] %s152
      %155 = dma.vmem_to_hbm [thread:$0]  %s153, 16, %s3, [#allocation5]
    $region37: #{tpu_custom_call.1} parent=1 // pred_fallthru
      _
    // Predicated region
    $region38: #{tpu_custom_call.1} parent=1 // pred_check
      _
    $region39: #{tpu_custom_call.1} parent=1 // pred_check_branch
      %157 = sbr.rel (0) target = $region41
    $region40: #{tpu_custom_call.1} parent=1 // pred_region
      %158 = dma.done [#allocation5], 16
    $region41: #{tpu_custom_call.1} parent=1 // pred_fallthru
      _
    %159 = vsyncpa [#allocation4], 1
    %160 = vsyncpa [#allocation7], 1
    %161 = vsyncpa [#allocation5], 1

</llo_original>
